<compile_context>
chip_gen: v6e
topology: v6e:2x2x1
jax: 0.10.0
libtpu: 0.0.40
codegen_flags: <defaults>
</compile_context>

<pallas_src>
from functools import partial

import jax
import jax.numpy as jnp
from jax.experimental import pallas as pl
from jax.experimental.pallas import tpu as pltpu

LEAK = 0.2
BN_EPS = 1e-5
K = 4  # conv kernel size used by every layer of this encoder


# ---------------------------------------------------------------------------
# The single fused Pallas kernel.
# ---------------------------------------------------------------------------
def _netd_fused_kernel(p1w_ref, w1blk_ref, w2_ref, bn_ref, w3_ref,
                       feat_ref, cls_ref, *, B, h2, ndf2):
    """Entire NetD forward on one VMEM-resident block.

    p1w_ref  : (M, K*K*K*K*nc)        bf16  two-level im2col patches (M = B*h2*h2)
    w1blk_ref: (K*K*K*K*nc, K*K*ndf)  bf16  block-diag(w1) -> result is layer-2 patch matrix
    w2_ref   : (K*K*ndf, ndf2)        bf16  layer-2 weight, rows in (kh, kw, ic) order
    bn_ref   : (2, ndf2)              f32   row 0 = gamma, row 1 = beta
    w3_ref   : (h2*h2, ndf2)          f32   classifier weight, rows in (h, w) order
    feat_ref : (M, ndf2)              f32   -> NetD "features"   (NHWC rows)
    cls_ref  : (B, 1)                 f32   -> NetD "classifier" (reshaped outside)
    """
    f32 = jnp.float32
    M = B * h2 * h2

    # ---- layer 1 (Conv + LeakyReLU) evaluated at every layer-2 tap position ----------
    # One K=1024, N=128 MXU matmul.  Zero patch rows (layer-2 padding) stay exactly 0.
    p2 = jnp.dot(p1w_ref[...], w1blk_ref[...], preferred_element_type=f32)   # (M, 128)
    p2 = jnp.maximum(p2, LEAK * p2)                                          # LeakyReLU(0.2)

    # ---- layer 2 conv: one K=128 matmul -----------------------------------------------
    pre2 = jnp.dot(p2.astype(jnp.bfloat16), w2_ref[...],
                   preferred_element_type=f32)                               # (M, ndf2)

    # ---- BatchNorm2d (train-mode batch stats, biased variance) + affine + LeakyReLU ---
    # Single-pass stats folded into one scale/shift (f32 on the VPU).
    inv_m = 1.0 / M
    mean = jnp.sum(pre2, axis=0, keepdims=True) * inv_m
    ex2 = jnp.sum(pre2 * pre2, axis=0, keepdims=True) * inv_m
    var = ex2 - mean * mean
    bn = bn_ref[...]
    scale = bn[0:1, :] * jax.lax.rsqrt(var + BN_EPS)
    shift = bn[1:2, :] - mean * scale
    y2 = pre2 * scale + shift
    y2 = jnp.maximum(y2, LEAK * y2)                                          # LeakyReLU(0.2)
    feat_ref[...] = y2                                                       # NetD features

    # ---- layer 3 (classifier): Conv(2ndf->1, 4, s1, p0) + Sigmoid ---------------------
    # The 4x4 window covers the whole h2 x h2 map -> per-image weighted sum of y2.
    y2r = y2.reshape(B, h2 * h2, ndf2)          # leading-dim split only (layout preserving)
    t = y2r * w3_ref[...].reshape(1, h2 * h2, ndf2)
    logit = jnp.sum(jnp.sum(t, axis=2, keepdims=True), axis=1)               # (B, 1)
    cls_ref[...] = jax.nn.sigmoid(logit)


def _vmem_spec():
    return pl.BlockSpec(memory_space=pltpu.MemorySpace.VMEM)


# ---------------------------------------------------------------------------
# Wrapper glue: two-level im2col on the input + weight layout prep.
# ---------------------------------------------------------------------------
def _two_level_patches(x_nhwc, h1, h2):
    """Layer-1 patches gathered at every layer-2 tap; pure layout work, fused by XLA."""
    B, _, _, nc = x_nhwc.shape
    # Layer-1 im2col (4x4, stride 2, pad 1): one patch per layer-1 output pixel,
    # columns in (kh, kw, ic) order.
    xp = jnp.pad(x_nhwc, ((0, 0), (1, 1), (1, 1), (0, 0)))
    cols = [xp[:, i:i + 2 * h1:2, j:j + 2 * h1:2, :] for i in range(K) for j in range(K)]
    pl1 = jnp.stack(cols, axis=3).reshape(B, h1, h1, K * K * nc)       # (B, h1, h1, 16*nc)
    # Layer-2 gather of those patches (4x4, stride 2, pad 1): padded positions become
    # all-zero rows, which stay zero through matmul + LeakyReLU in the kernel.
    pl1p = jnp.pad(pl1, ((0, 0), (1, 1), (1, 1), (0, 0)))              # (B, h1+2, h1+2, ...)
    taps = [pl1p[:, i:i + 2 * h2:2, j:j + 2 * h2:2, :] for i in range(K) for j in range(K)]
    p1w = jnp.stack(taps, axis=3)                                      # (B, h2, h2, 16, 16*nc)
    return p1w.reshape(B * h2 * h2, K * K * K * K * nc)


def init_params(key, nc=4, ndf=8, nz=1):
    """DCGAN-style init; conv weights kept in PyTorch (OC, IC, KH, KW) layout."""
    k1, k2, k3, k4 = jax.random.split(key, 4)
    return {
        "w1": 0.02 * jax.random.normal(k1, (ndf, nc, K, K), jnp.float32),
        "w2": 0.02 * jax.random.normal(k2, (2 * ndf, ndf, K, K), jnp.float32),
        "w3": 0.02 * jax.random.normal(k3, (nz, 2 * ndf, K, K), jnp.float32),
        "bn2_gamma": 1.0 + 0.02 * jax.random.normal(k4, (2 * ndf,), jnp.float32),
        "bn2_beta": jnp.zeros((2 * ndf,), jnp.float32),
    }


def netd_forward(params, x_nchw):
    """NetD.forward: returns (classifier, features) in NCHW, like the PyTorch module."""
    B, nc, H, W = x_nchw.shape
    assert H == W == 16, "this encoder is the isize=16 DCGAN variant"
    ndf = params["w1"].shape[0]
    ndf2 = 2 * ndf
    h1, h2 = H // 2, H // 4                                            # 8, 4
    M = B * h2 * h2

    x = jnp.transpose(x_nchw, (0, 2, 3, 1)).astype(jnp.float32)        # NCHW -> NHWC
    p1w = _two_level_patches(x, h1, h2).astype(jnp.bfloat16)           # (M, 1024)

    # Conv weights -> matmul layouts with (kh, kw, ic) row order (matches patch columns).
    w1m = jnp.transpose(params["w1"], (2, 3, 1, 0)).reshape(K * K * nc, ndf)
    w1blk = jnp.kron(jnp.eye(K * K, dtype=jnp.float32), w1m).astype(jnp.bfloat16)  # (1024, 128)
    w2m = (jnp.transpose(params["w2"], (2, 3, 1, 0))
           .reshape(K * K * ndf, ndf2).astype(jnp.bfloat16))                        # (128, ndf2)
    w3m = jnp.transpose(params["w3"], (2, 3, 1, 0)).reshape(h2 * h2, ndf2)          # f32 (VPU path)
    bn = jnp.stack([params["bn2_gamma"], params["bn2_beta"]], axis=0)               # (2, ndf2)

    feat_mat, cls_mat = pl.pallas_call(
        partial(_netd_fused_kernel, B=B, h2=h2, ndf2=ndf2),
        out_shape=(jax.ShapeDtypeStruct((M, ndf2), jnp.float32),
                   jax.ShapeDtypeStruct((B, 1), jnp.float32)),
        in_specs=[_vmem_spec()] * 5,
        out_specs=(_vmem_spec(), _vmem_spec()),
    )(p1w, w1blk, w2m, bn, w3m)

    features = jnp.transpose(feat_mat.reshape(B, h2, h2, ndf2), (0, 3, 1, 2))  # NCHW
    classifier = cls_mat.reshape(B, 1, 1, 1)                                   # NCHW
    return classifier, features


# ---------------------------------------------------------------------------
# Plain-XLA f32 reference (train-mode BN) used only for the numerical self-check.
# ---------------------------------------------------------------------------
def _reference_forward(params, x_nchw):
    dn = ("NCHW", "OIHW", "NCHW")
    prec = jax.lax.Precision.HIGHEST
    y1 = jax.lax.conv_general_dilated(x_nchw, params["w1"], (2, 2), ((1, 1), (1, 1)),
                                      dimension_numbers=dn, precision=prec)
    y1 = jnp.where(y1 > 0, y1, LEAK * y1)
    y2 = jax.lax.conv_general_dilated(y1, params["w2"], (2, 2), ((1, 1), (1, 1)),
                                      dimension_numbers=dn, precision=prec)
    mean = jnp.mean(y2, axis=(0, 2, 3), keepdims=True)
    var = jnp.mean(jnp.square(y2 - mean), axis=(0, 2, 3), keepdims=True)
    y2 = (y2 - mean) * jax.lax.rsqrt(var + BN_EPS)
    y2 = y2 * params["bn2_gamma"].reshape(1, -1, 1, 1) + params["bn2_beta"].reshape(1, -1, 1, 1)
    y2 = jnp.where(y2 > 0, y2, LEAK * y2)
    cls = jax.lax.conv_general_dilated(y2, params["w3"], (1, 1), ((0, 0), (0, 0)),
                                       dimension_numbers=dn, precision=prec)
    return jax.nn.sigmoid(cls), y2


if __name__ == "__main__":
    key = jax.random.PRNGKey(0)
    kx, kp = jax.random.split(key)

    x = jax.random.normal(kx, (2, 4, 16, 16), jnp.float32)   # NCHW input
    params = init_params(kp, nc=4, ndf=8, nz=1)

    classifier, features = jax.jit(netd_forward)(params, x)
    jax.block_until_ready((classifier, features))

    assert classifier.shape == (2, 1, 1, 1), classifier.shape
    assert features.shape == (2, 16, 4, 4), features.shape
    assert bool(jnp.all(jnp.isfinite(classifier))) and bool(jnp.all(jnp.isfinite(features)))

    # Self-check against an f32 conv reference.  Tolerance is sized for the bf16 MXU
    # operands (per perf review); post-matmul math / BN stats are f32 in both paths.
    ref_cls, ref_feat = _reference_forward(params, x)
    assert jnp.allclose(classifier, ref_cls, atol=5e-2, rtol=5e-2), \
        float(jnp.max(jnp.abs(classifier - ref_cls)))
    assert jnp.allclose(features, ref_feat, atol=5e-2, rtol=5e-2), \
        float(jnp.max(jnp.abs(features - ref_feat)))

    print("KERNEL_OK")
</pallas_src>

<mosaic_0001>
module attributes {stable_mosaic.version = 11 : i64} {
  func.func @_netd_fused_kernel(%arg0: memref<32x1024xbf16, #tpu.memory_space<vmem>>, %arg1: memref<1024x128xbf16, #tpu.memory_space<vmem>>, %arg2: memref<128x16xbf16, #tpu.memory_space<vmem>>, %arg3: memref<2x16xf32, #tpu.memory_space<vmem>>, %arg4: memref<16x16xf32, #tpu.memory_space<vmem>>, %arg5: memref<32x16xf32, #tpu.memory_space<vmem>>, %arg6: memref<2x1xf32, #tpu.memory_space<vmem>>) attributes {dimension_semantics = [], scalar_prefetch = 0 : i64, scratch_operands = 0 : i64, tpu.core_type = #tpu.core_type<tc>} {
    %c0 = arith.constant 0 : index
    %c0_0 = arith.constant 0 : index
    %0 = vector.load %arg0[%c0, %c0_0] : memref<32x1024xbf16, #tpu.memory_space<vmem>>, vector<32x1024xbf16>
    %c0_1 = arith.constant 0 : index
    %c0_2 = arith.constant 0 : index
    %1 = vector.load %arg1[%c0_1, %c0_2] : memref<1024x128xbf16, #tpu.memory_space<vmem>>, vector<1024x128xbf16>
    %cst = arith.constant dense<0.000000e+00> : vector<32x128xf32>
    %2 = tpu.matmul %0, %1, %cst {dimension_numbers = #tpu.dot_dimension_numbers<[1], [0], [0], [1], [0, 0, 1, 1], [], []>} : vector<32x1024xbf16>, vector<1024x128xbf16>, vector<32x128xf32> -> vector<32x128xf32>
    %cst_3 = arith.constant 2.000000e-01 : f32
    %3 = vector.broadcast %cst_3 : f32 to vector<32x128xf32>
    %4 = arith.mulf %3, %2 : vector<32x128xf32>
    %5 = arith.maximumf %2, %4 : vector<32x128xf32>
    %6 = arith.truncf %5 : vector<32x128xf32> to vector<32x128xbf16>
    %c0_4 = arith.constant 0 : index
    %c0_5 = arith.constant 0 : index
    %7 = vector.load %arg2[%c0_4, %c0_5] : memref<128x16xbf16, #tpu.memory_space<vmem>>, vector<128x16xbf16>
    %cst_6 = arith.constant dense<0.000000e+00> : vector<32x16xf32>
    %8 = tpu.matmul %6, %7, %cst_6 {dimension_numbers = #tpu.dot_dimension_numbers<[1], [0], [0], [1], [0, 0, 1, 1], [], []>} : vector<32x128xbf16>, vector<128x16xbf16>, vector<32x16xf32> -> vector<32x16xf32>
    %cst_7 = arith.constant dense<0.000000e+00> : vector<16xf32>
    %9 = vector.multi_reduction <add>, %8, %cst_7 [0] : vector<32x16xf32> to vector<16xf32>
    %10 = vector.shape_cast %9 : vector<16xf32> to vector<1x16xf32>
    %cst_8 = arith.constant 3.125000e-02 : f32
    %11 = vector.broadcast %cst_8 : f32 to vector<1x16xf32>
    %12 = arith.mulf %10, %11 : vector<1x16xf32>
    %13 = arith.mulf %8, %8 : vector<32x16xf32>
    %cst_9 = arith.constant dense<0.000000e+00> : vector<16xf32>
    %14 = vector.multi_reduction <add>, %13, %cst_9 [0] : vector<32x16xf32> to vector<16xf32>
    %15 = vector.shape_cast %14 : vector<16xf32> to vector<1x16xf32>
    %cst_10 = arith.constant 3.125000e-02 : f32
    %16 = vector.broadcast %cst_10 : f32 to vector<1x16xf32>
    %17 = arith.mulf %15, %16 : vector<1x16xf32>
    %18 = arith.mulf %12, %12 : vector<1x16xf32>
    %19 = arith.subf %17, %18 : vector<1x16xf32>
    %c0_11 = arith.constant 0 : index
    %c0_12 = arith.constant 0 : index
    %20 = vector.load %arg3[%c0_11, %c0_12] : memref<2x16xf32, #tpu.memory_space<vmem>>, vector<2x16xf32>
    %21 = vector.extract_strided_slice %20 {offsets = [0, 0], sizes = [1, 16], strides = [1, 1]} : vector<2x16xf32> to vector<1x16xf32>
    %cst_13 = arith.constant 9.99999974E-6 : f32
    %22 = vector.broadcast %cst_13 : f32 to vector<1x16xf32>
    %23 = arith.addf %19, %22 : vector<1x16xf32>
    %24 = math.rsqrt %23 : vector<1x16xf32>
    %25 = arith.mulf %21, %24 : vector<1x16xf32>
    %26 = vector.extract_strided_slice %20 {offsets = [1, 0], sizes = [1, 16], strides = [1, 1]} : vector<2x16xf32> to vector<1x16xf32>
    %27 = arith.mulf %12, %25 : vector<1x16xf32>
    %28 = arith.subf %26, %27 : vector<1x16xf32>
    %29 = vector.broadcast %25 : vector<1x16xf32> to vector<32x16xf32>
    %30 = arith.mulf %8, %29 : vector<32x16xf32>
    %31 = vector.broadcast %28 : vector<1x16xf32> to vector<32x16xf32>
    %32 = arith.addf %30, %31 : vector<32x16xf32>
    %cst_14 = arith.constant 2.000000e-01 : f32
    %33 = vector.broadcast %cst_14 : f32 to vector<32x16xf32>
    %34 = arith.mulf %33, %32 : vector<32x16xf32>
    %35 = arith.maximumf %32, %34 : vector<32x16xf32>
    %c0_15 = arith.constant 0 : index
    %c0_16 = arith.constant 0 : index
    %36 = vector.load %arg5[%c0_15, %c0_16] : memref<32x16xf32, #tpu.memory_space<vmem>>, vector<32x16xf32>
    tpu.vector_store %arg5[%c0_15, %c0_16], %35 {strides = array<i32>} : memref<32x16xf32, #tpu.memory_space<vmem>>, vector<32x16xf32>,
    %37 = vector.shape_cast %35 : vector<32x16xf32> to vector<2x16x16xf32>
    %c0_17 = arith.constant 0 : index
    %c0_18 = arith.constant 0 : index
    %38 = vector.load %arg4[%c0_17, %c0_18] : memref<16x16xf32, #tpu.memory_space<vmem>>, vector<16x16xf32>
    %39 = vector.shape_cast %38 : vector<16x16xf32> to vector<1x16x16xf32>
    %40 = vector.broadcast %39 : vector<1x16x16xf32> to vector<2x16x16xf32>
    %41 = arith.mulf %37, %40 : vector<2x16x16xf32>
    %cst_19 = arith.constant dense<0.000000e+00> : vector<2x16xf32>
    %42 = vector.multi_reduction <add>, %41, %cst_19 [2] : vector<2x16x16xf32> to vector<2x16xf32>
    %43 = vector.shape_cast %42 : vector<2x16xf32> to vector<2x16x1xf32>
    %cst_20 = arith.constant dense<0.000000e+00> : vector<2x1xf32>
    %44 = vector.multi_reduction <add>, %43, %cst_20 [1] : vector<2x16x1xf32> to vector<2x1xf32>
    %45 = arith.negf %44 : vector<2x1xf32>
    %46 = math.exp %45 : vector<2x1xf32>
    %cst_21 = arith.constant 1.000000e+00 : f32
    %47 = vector.broadcast %cst_21 : f32 to vector<2x1xf32>
    %48 = arith.addf %47, %46 : vector<2x1xf32>
    %49 = arith.divf %47, %48 : vector<2x1xf32>
    %c0_22 = arith.constant 0 : index
    %c0_23 = arith.constant 0 : index
    %50 = vector.load %arg6[%c0_22, %c0_23] : memref<2x1xf32, #tpu.memory_space<vmem>>, vector<2x1xf32>
    tpu.vector_store %arg6[%c0_22, %c0_23], %49 {strides = array<i32>} : memref<2x1xf32, #tpu.memory_space<vmem>>, vector<2x1xf32>,
    return
  }
}

</mosaic_0001>

<llo_original>
// kernel: netd_forward.1
$region0: #{netd_forward.1}
  #allocation0 [shape = 'u32[]', space=smem, size = 0x4, offset = 0x4, fixed_abs, tag = 'smem constant byte address 0x4 - core index']
  #allocation1 [shape = 'u32[144,128]{1,0:T(1,128)}', space=vmem, size = 0x12000, scoped, tag = 'internal scratch']
  %s0 = inlined_call_operand.vmem [shape: bf16[32,1024], index: 0, kind: input, shape index: {}]
  %s1 = inlined_call_operand.vmem [shape: bf16[1024,128], index: 1, kind: input, shape index: {}]
  %s2 = inlined_call_operand.vmem [shape: bf16[128,16], index: 2, kind: input, shape index: {}]
  %s3 = inlined_call_operand.vmem [shape: f32[2,16], index: 3, kind: input, shape index: {}]
  %s4 = inlined_call_operand.vmem [shape: f32[16,16], index: 4, kind: input, shape index: {}]
  %s5 = inlined_call_operand.hbm [shape: f32[32,16], index: 5, kind: output, shape index: {0}]
  %s6 = inlined_call_operand.vmem [shape: f32[2,1], index: 6, kind: output, shape index: {1}]
  %7 = xla_tuple %s5, %s6
  %s8 = sld [smem:[#allocation0]]
  $region38: #{netd_forward.1} parent=0
    _
  %s10 = ssub.s32 1, %s8
  %s11 = scalar_select 0, %s10, %s8
  $region1: #{netd_forward.1} parent=0
    #allocation2 [shape = 'u8[16384]{0}', space=vmem, size = 0x4000, scoped, tag = 'output window, operand 0, single buffered']
    #allocation3 [shape = 's32[1]{0}', space=sflag, size = 0x4, scoped, tag = 'scoped memory for netd_forward.1']
    %12 = vsyncpa [#allocation3], 0
    // Predicated region
    $region2: #{netd_forward.1} parent=1 // pred_check
      _
    $region3: #{netd_forward.1} parent=1 // pred_check_branch
      %14 = sbr.rel (0) target = $region5
    $region4: #{netd_forward.1} parent=1 // pred_region
      _
    $region5: #{netd_forward.1} parent=1 // pred_fallthru
      _
    // Predicated region
    $region6: #{netd_forward.1} parent=1 // pred_check
      _
    $region7: #{netd_forward.1} parent=1 // pred_check_branch
      %16 = sbr.rel (0) target = $region9
    $region8: #{netd_forward.1} parent=1 // pred_region
      _
    $region9: #{netd_forward.1} parent=1 // pred_fallthru
      _
    // Predicated region
    $region10: #{netd_forward.1} parent=1 // pred_check
      _
    $region11: #{netd_forward.1} parent=1 // pred_check_branch
      %18 = sbr.rel (0) target = $region13
    $region12: #{netd_forward.1} parent=1 // pred_region
      _
    $region13: #{netd_forward.1} parent=1 // pred_fallthru
      _
    // Predicated region
    $region14: #{netd_forward.1} parent=1 // pred_check
      _
    $region15: #{netd_forward.1} parent=1 // pred_check_branch
      %20 = sbr.rel (0) target = $region17
    $region16: #{netd_forward.1} parent=1 // pred_region
      _
    $region17: #{netd_forward.1} parent=1 // pred_fallthru
      _
    // Predicated region
    $region18: #{netd_forward.1} parent=1 // pred_check
      _
    $region19: #{netd_forward.1} parent=1 // pred_check_branch
      %22 = sbr.rel (0) target = $region21
    $region20: #{netd_forward.1} parent=1 // pred_region
      _
    $region21: #{netd_forward.1} parent=1 // pred_fallthru
      _
    %v24 = vld [vmem:[%s0] sm:$0xff]
    %v25 = vld [vmem:[%s0 + $0x8] sm:$0xff]
    %v26 = vld [vmem:[%s0 + $0x10] sm:$0xff]
    %v27 = vld [vmem:[%s0 + $0x18] sm:$0xff]
    %v28 = vld [vmem:[%s0 + $0x20] sm:$0xff]
    %v29 = vld [vmem:[%s0 + $0x28] sm:$0xff]
    %v30 = vld [vmem:[%s0 + $0x30] sm:$0xff]
    %v31 = vld [vmem:[%s0 + $0x38] sm:$0xff]
    %v32 = vld [vmem:[%s0 + $0x40] sm:$0xff]
    %v33 = vld [vmem:[%s0 + $0x48] sm:$0xff]
    %v34 = vld [vmem:[%s0 + $0x50] sm:$0xff]
    %v35 = vld [vmem:[%s0 + $0x58] sm:$0xff]
    %v36 = vld [vmem:[%s0 + $0x60] sm:$0xff]
    %v37 = vld [vmem:[%s0 + $0x68] sm:$0xff]
    %v38 = vld [vmem:[%s0 + $0x70] sm:$0xff]
    %v39 = vld [vmem:[%s0 + $0x78] sm:$0xff]
    %v40 = vld [vmem:[%s1] sm:$0xf]
    %v41 = vld [vmem:[%s1 + $0x4] sm:$0xf]
    %v42 = vld [vmem:[%s1 + $0x8] sm:$0xf]
    %v43 = vld [vmem:[%s1 + $0xc] sm:$0xf]
    %v44 = vld [vmem:[%s1 + $0x10] sm:$0xf]
    %v45 = vld [vmem:[%s1 + $0x14] sm:$0xf]
    %v46 = vld [vmem:[%s1 + $0x18] sm:$0xf]
    %v47 = vld [vmem:[%s1 + $0x1c] sm:$0xf]
    %v48 = vld [vmem:[%s1 + $0x20] sm:$0xf]
    %v49 = vld [vmem:[%s1 + $0x24] sm:$0xf]
    %v50 = vld [vmem:[%s1 + $0x28] sm:$0xf]
    %v51 = vld [vmem:[%s1 + $0x2c] sm:$0xf]
    %v52 = vld [vmem:[%s1 + $0x30] sm:$0xf]
    %v53 = vld [vmem:[%s1 + $0x34] sm:$0xf]
    %v54 = vld [vmem:[%s1 + $0x38] sm:$0xf]
    %v55 = vld [vmem:[%s1 + $0x3c] sm:$0xf]
    %v56 = vld [vmem:[%s1 + $0x40] sm:$0xf]
    %v57 = vld [vmem:[%s1 + $0x44] sm:$0xf]
    %v58 = vld [vmem:[%s1 + $0x48] sm:$0xf]
    %v59 = vld [vmem:[%s1 + $0x4c] sm:$0xf]
    %v60 = vld [vmem:[%s1 + $0x50] sm:$0xf]
    %v61 = vld [vmem:[%s1 + $0x54] sm:$0xf]
    %v62 = vld [vmem:[%s1 + $0x58] sm:$0xf]
    %v63 = vld [vmem:[%s1 + $0x5c] sm:$0xf]
    %v64 = vld [vmem:[%s1 + $0x60] sm:$0xf]
    %v65 = vld [vmem:[%s1 + $0x64] sm:$0xf]
    %v66 = vld [vmem:[%s1 + $0x68] sm:$0xf]
    %v67 = vld [vmem:[%s1 + $0x6c] sm:$0xf]
    %v68 = vld [vmem:[%s1 + $0x70] sm:$0xf]
    %v69 = vld [vmem:[%s1 + $0x74] sm:$0xf]
    %v70 = vld [vmem:[%s1 + $0x78] sm:$0xf]
    %v71 = vld [vmem:[%s1 + $0x7c] sm:$0xf]
    %v72 = vld [vmem:[%s1 + $0x80] sm:$0xf]
    %v73 = vld [vmem:[%s1 + $0x84] sm:$0xf]
    %v74 = vld [vmem:[%s1 + $0x88] sm:$0xf]
    %v75 = vld [vmem:[%s1 + $0x8c] sm:$0xf]
    %v76 = vld [vmem:[%s1 + $0x90] sm:$0xf]
    %v77 = vld [vmem:[%s1 + $0x94] sm:$0xf]
    %v78 = vld [vmem:[%s1 + $0x98] sm:$0xf]
    %v79 = vld [vmem:[%s1 + $0x9c] sm:$0xf]
    %v80 = vld [vmem:[%s1 + $0xa0] sm:$0xf]
    %v81 = vld [vmem:[%s1 + $0xa4] sm:$0xf]
    %v82 = vld [vmem:[%s1 + $0xa8] sm:$0xf]
    %v83 = vld [vmem:[%s1 + $0xac] sm:$0xf]
    %v84 = vld [vmem:[%s1 + $0xb0] sm:$0xf]
    %v85 = vld [vmem:[%s1 + $0xb4] sm:$0xf]
    %v86 = vld [vmem:[%s1 + $0xb8] sm:$0xf]
    %v87 = vld [vmem:[%s1 + $0xbc] sm:$0xf]
    %v88 = vld [vmem:[%s1 + $0xc0] sm:$0xf]
    %v89 = vld [vmem:[%s1 + $0xc4] sm:$0xf]
    %v90 = vld [vmem:[%s1 + $0xc8] sm:$0xf]
    %v91 = vld [vmem:[%s1 + $0xcc] sm:$0xf]
    %v92 = vld [vmem:[%s1 + $0xd0] sm:$0xf]
    %v93 = vld [vmem:[%s1 + $0xd4] sm:$0xf]
    %v94 = vld [vmem:[%s1 + $0xd8] sm:$0xf]
    %v95 = vld [vmem:[%s1 + $0xdc] sm:$0xf]
    %v96 = vld [vmem:[%s1 + $0xe0] sm:$0xf]
    %v97 = vld [vmem:[%s1 + $0xe4] sm:$0xf]
    %v98 = vld [vmem:[%s1 + $0xe8] sm:$0xf]
    %v99 = vld [vmem:[%s1 + $0xec] sm:$0xf]
    %v100 = vld [vmem:[%s1 + $0xf0] sm:$0xf]
    %v101 = vld [vmem:[%s1 + $0xf4] sm:$0xf]
    %v102 = vld [vmem:[%s1 + $0xf8] sm:$0xf]
    %v103 = vld [vmem:[%s1 + $0xfc] sm:$0xf]
    %v104 = vld [vmem:[%s1 + $0x100] sm:$0xf]
    %v105 = vld [vmem:[%s1 + $0x104] sm:$0xf]
    %v106 = vld [vmem:[%s1 + $0x108] sm:$0xf]
    %v107 = vld [vmem:[%s1 + $0x10c] sm:$0xf]
    %v108 = vld [vmem:[%s1 + $0x110] sm:$0xf]
    %v109 = vld [vmem:[%s1 + $0x114] sm:$0xf]
    %v110 = vld [vmem:[%s1 + $0x118] sm:$0xf]
    %v111 = vld [vmem:[%s1 + $0x11c] sm:$0xf]
    %v112 = vld [vmem:[%s1 + $0x120] sm:$0xf]
    %v113 = vld [vmem:[%s1 + $0x124] sm:$0xf]
    %v114 = vld [vmem:[%s1 + $0x128] sm:$0xf]
    %v115 = vld [vmem:[%s1 + $0x12c] sm:$0xf]
    %v116 = vld [vmem:[%s1 + $0x130] sm:$0xf]
    %v117 = vld [vmem:[%s1 + $0x134] sm:$0xf]
    %v118 = vld [vmem:[%s1 + $0x138] sm:$0xf]
    %v119 = vld [vmem:[%s1 + $0x13c] sm:$0xf]
    %v120 = vld [vmem:[%s1 + $0x140] sm:$0xf]
    %v121 = vld [vmem:[%s1 + $0x144] sm:$0xf]
    %v122 = vld [vmem:[%s1 + $0x148] sm:$0xf]
    %v123 = vld [vmem:[%s1 + $0x14c] sm:$0xf]
    %v124 = vld [vmem:[%s1 + $0x150] sm:$0xf]
    %v125 = vld [vmem:[%s1 + $0x154] sm:$0xf]
    %v126 = vld [vmem:[%s1 + $0x158] sm:$0xf]
    %v127 = vld [vmem:[%s1 + $0x15c] sm:$0xf]
    %v128 = vld [vmem:[%s1 + $0x160] sm:$0xf]
    %v129 = vld [vmem:[%s1 + $0x164] sm:$0xf]
    %v130 = vld [vmem:[%s1 + $0x168] sm:$0xf]
    %v131 = vld [vmem:[%s1 + $0x16c] sm:$0xf]
    %v132 = vld [vmem:[%s1 + $0x170] sm:$0xf]
    %v133 = vld [vmem:[%s1 + $0x174] sm:$0xf]
    %v134 = vld [vmem:[%s1 + $0x178] sm:$0xf]
    %v135 = vld [vmem:[%s1 + $0x17c] sm:$0xf]
    %v136 = vld [vmem:[%s1 + $0x180] sm:$0xf]
    %v137 = vld [vmem:[%s1 + $0x184] sm:$0xf]
    %v138 = vld [vmem:[%s1 + $0x188] sm:$0xf]
    %v139 = vld [vmem:[%s1 + $0x18c] sm:$0xf]
    %v140 = vld [vmem:[%s1 + $0x190] sm:$0xf]
    %v141 = vld [vmem:[%s1 + $0x194] sm:$0xf]
    %v142 = vld [vmem:[%s1 + $0x198] sm:$0xf]
    %v143 = vld [vmem:[%s1 + $0x19c] sm:$0xf]
    %v144 = vld [vmem:[%s1 + $0x1a0] sm:$0xf]
    %v145 = vld [vmem:[%s1 + $0x1a4] sm:$0xf]
    %v146 = vld [vmem:[%s1 + $0x1a8] sm:$0xf]
    %v147 = vld [vmem:[%s1 + $0x1ac] sm:$0xf]
    %v148 = vld [vmem:[%s1 + $0x1b0] sm:$0xf]
    %v149 = vld [vmem:[%s1 + $0x1b4] sm:$0xf]
    %v150 = vld [vmem:[%s1 + $0x1b8] sm:$0xf]
    %v151 = vld [vmem:[%s1 + $0x1bc] sm:$0xf]
    %v152 = vld [vmem:[%s1 + $0x1c0] sm:$0xf]
    %v153 = vld [vmem:[%s1 + $0x1c4] sm:$0xf]
    %v154 = vld [vmem:[%s1 + $0x1c8] sm:$0xf]
    %v155 = vld [vmem:[%s1 + $0x1cc] sm:$0xf]
    %v156 = vld [vmem:[%s1 + $0x1d0] sm:$0xf]
    %v157 = vld [vmem:[%s1 + $0x1d4] sm:$0xf]
    %v158 = vld [vmem:[%s1 + $0x1d8] sm:$0xf]
    %v159 = vld [vmem:[%s1 + $0x1dc] sm:$0xf]
    %v160 = vld [vmem:[%s1 + $0x1e0] sm:$0xf]
    %v161 = vld [vmem:[%s1 + $0x1e4] sm:$0xf]
    %v162 = vld [vmem:[%s1 + $0x1e8] sm:$0xf]
    %v163 = vld [vmem:[%s1 + $0x1ec] sm:$0xf]
    %v164 = vld [vmem:[%s1 + $0x1f0] sm:$0xf]
    %v165 = vld [vmem:[%s1 + $0x1f4] sm:$0xf]
    %v166 = vld [vmem:[%s1 + $0x1f8] sm:$0xf]
    %v167 = vld [vmem:[%s1 + $0x1fc] sm:$0xf]
    %v184 = vunpack.c.l.b16 %v24
    %v185 = vunpack.c.h.b16 %v24
    %v186 = vunpack.c.l.b16 %v25
    %v187 = vunpack.c.h.b16 %v25
    %v188 = vunpack.c.l.b16 %v26
    %v189 = vunpack.c.h.b16 %v26
    %v190 = vunpack.c.l.b16 %v27
    %v191 = vunpack.c.h.b16 %v27
    %v192 = vunpack.c.l.b16 %v28
    %v193 = vunpack.c.h.b16 %v28
    %v194 = vunpack.c.l.b16 %v29
    %v195 = vunpack.c.h.b16 %v29
    %v196 = vunpack.c.l.b16 %v30
    %v197 = vunpack.c.h.b16 %v30
    %v198 = vunpack.c.l.b16 %v31
    %v199 = vunpack.c.h.b16 %v31
    %v200 = vunpack.c.l.b16 %v32
    %v201 = vunpack.c.h.b16 %v32
    %v202 = vunpack.c.l.b16 %v33
    %v203 = vunpack.c.h.b16 %v33
    %v204 = vunpack.c.l.b16 %v34
    %v205 = vunpack.c.h.b16 %v34
    %v206 = vunpack.c.l.b16 %v35
    %v207 = vunpack.c.h.b16 %v35
    %v208 = vunpack.c.l.b16 %v36
    %v209 = vunpack.c.h.b16 %v36
    %v210 = vunpack.c.l.b16 %v37
    %v211 = vunpack.c.h.b16 %v37
    %v212 = vunpack.c.l.b16 %v38
    %v213 = vunpack.c.h.b16 %v38
    %v214 = vunpack.c.l.b16 %v39
    %v215 = vunpack.c.h.b16 %v39
    %v216 = vpack.c.b16 %v192, %v184
    %v217 = vpack.c.b16 %v193, %v185
    %v218 = vpack.c.b16 %v194, %v186
    %v219 = vpack.c.b16 %v195, %v187
    %v220 = vpack.c.b16 %v196, %v188
    %v221 = vpack.c.b16 %v197, %v189
    %v222 = vpack.c.b16 %v198, %v190
    %v223 = vpack.c.b16 %v199, %v191
    %v224 = vpack.c.b16 %v208, %v200
    %v225 = vpack.c.b16 %v209, %v201
    %v226 = vpack.c.b16 %v210, %v202
    %v227 = vpack.c.b16 %v211, %v203
    %v228 = vpack.c.b16 %v212, %v204
    %v229 = vpack.c.b16 %v213, %v205
    %v230 = vpack.c.b16 %v214, %v206
    %v231 = vpack.c.b16 %v215, %v207
    %v376 = vunpack.c.l.b16 %v40
    %v377 = vunpack.c.l.b16 %v41
    %v378 = vunpack.c.l.b16 %v42
    %v379 = vunpack.c.l.b16 %v43
    %v380 = vunpack.c.l.b16 %v44
    %v381 = vunpack.c.l.b16 %v45
    %v382 = vunpack.c.l.b16 %v46
    %v383 = vunpack.c.l.b16 %v47
    %v384 = vunpack.c.l.b16 %v48
    %v385 = vunpack.c.l.b16 %v49
    %v386 = vunpack.c.l.b16 %v50
    %v387 = vunpack.c.l.b16 %v51
    %v388 = vunpack.c.l.b16 %v52
    %v389 = vunpack.c.l.b16 %v53
    %v390 = vunpack.c.l.b16 %v54
    %v391 = vunpack.c.l.b16 %v55
    %v392 = vunpack.c.l.b16 %v56
    %v393 = vunpack.c.l.b16 %v57
    %v394 = vunpack.c.l.b16 %v58
    %v395 = vunpack.c.l.b16 %v59
    %v396 = vunpack.c.l.b16 %v60
    %v397 = vunpack.c.l.b16 %v61
    %v398 = vunpack.c.l.b16 %v62
    %v399 = vunpack.c.l.b16 %v63
    %v400 = vunpack.c.l.b16 %v64
    %v401 = vunpack.c.l.b16 %v65
    %v402 = vunpack.c.l.b16 %v66
    %v403 = vunpack.c.l.b16 %v67
    %v404 = vunpack.c.l.b16 %v68
    %v405 = vunpack.c.l.b16 %v69
    %v406 = vunpack.c.l.b16 %v70
    %v407 = vunpack.c.l.b16 %v71
    %v408 = vunpack.c.l.b16 %v72
    %v409 = vunpack.c.l.b16 %v73
    %v410 = vunpack.c.l.b16 %v74
    %v411 = vunpack.c.l.b16 %v75
    %v412 = vunpack.c.l.b16 %v76
    %v413 = vunpack.c.l.b16 %v77
    %v414 = vunpack.c.l.b16 %v78
    %v415 = vunpack.c.l.b16 %v79
    %v416 = vunpack.c.l.b16 %v80
    %v417 = vunpack.c.l.b16 %v81
    %v418 = vunpack.c.l.b16 %v82
    %v419 = vunpack.c.l.b16 %v83
    %v420 = vunpack.c.l.b16 %v84
    %v421 = vunpack.c.l.b16 %v85
    %v422 = vunpack.c.l.b16 %v86
    %v423 = vunpack.c.l.b16 %v87
    %v424 = vunpack.c.l.b16 %v88
    %v425 = vunpack.c.l.b16 %v89
    %v426 = vunpack.c.l.b16 %v90
    %v427 = vunpack.c.l.b16 %v91
    %v428 = vunpack.c.l.b16 %v92
    %v429 = vunpack.c.l.b16 %v93
    %v430 = vunpack.c.l.b16 %v94
    %v431 = vunpack.c.l.b16 %v95
    %v432 = vunpack.c.l.b16 %v96
    %v433 = vunpack.c.l.b16 %v97
    %v434 = vunpack.c.l.b16 %v98
    %v435 = vunpack.c.l.b16 %v99
    %v436 = vunpack.c.l.b16 %v100
    %v437 = vunpack.c.l.b16 %v101
    %v438 = vunpack.c.l.b16 %v102
    %v439 = vunpack.c.l.b16 %v103
    %v440 = vunpack.c.l.b16 %v104
    %v441 = vunpack.c.l.b16 %v105
    %v442 = vunpack.c.l.b16 %v106
    %v443 = vunpack.c.l.b16 %v107
    %v444 = vunpack.c.l.b16 %v108
    %v445 = vunpack.c.l.b16 %v109
    %v446 = vunpack.c.l.b16 %v110
    %v447 = vunpack.c.l.b16 %v111
    %v448 = vunpack.c.l.b16 %v112
    %v449 = vunpack.c.l.b16 %v113
    %v450 = vunpack.c.l.b16 %v114
    %v451 = vunpack.c.l.b16 %v115
    %v452 = vunpack.c.l.b16 %v116
    %v453 = vunpack.c.l.b16 %v117
    %v454 = vunpack.c.l.b16 %v118
    %v455 = vunpack.c.l.b16 %v119
    %v456 = vunpack.c.l.b16 %v120
    %v457 = vunpack.c.l.b16 %v121
    %v458 = vunpack.c.l.b16 %v122
    %v459 = vunpack.c.l.b16 %v123
    %v460 = vunpack.c.l.b16 %v124
    %v461 = vunpack.c.l.b16 %v125
    %v462 = vunpack.c.l.b16 %v126
    %v463 = vunpack.c.l.b16 %v127
    %v464 = vunpack.c.l.b16 %v128
    %v465 = vunpack.c.l.b16 %v129
    %v466 = vunpack.c.l.b16 %v130
    %v467 = vunpack.c.l.b16 %v131
    %v468 = vunpack.c.l.b16 %v132
    %v469 = vunpack.c.l.b16 %v133
    %v470 = vunpack.c.l.b16 %v134
    %v471 = vunpack.c.l.b16 %v135
    %v472 = vunpack.c.l.b16 %v136
    %v473 = vunpack.c.l.b16 %v137
    %v474 = vunpack.c.l.b16 %v138
    %v475 = vunpack.c.l.b16 %v139
    %v476 = vunpack.c.l.b16 %v140
    %v477 = vunpack.c.l.b16 %v141
    %v478 = vunpack.c.l.b16 %v142
    %v479 = vunpack.c.l.b16 %v143
    %v480 = vunpack.c.l.b16 %v144
    %v481 = vunpack.c.l.b16 %v145
    %v482 = vunpack.c.l.b16 %v146
    %v483 = vunpack.c.l.b16 %v147
    %v484 = vunpack.c.l.b16 %v148
    %v485 = vunpack.c.l.b16 %v149
    %v486 = vunpack.c.l.b16 %v150
    %v487 = vunpack.c.l.b16 %v151
    %v488 = vunpack.c.l.b16 %v152
    %v489 = vunpack.c.l.b16 %v153
    %v490 = vunpack.c.l.b16 %v154
    %v491 = vunpack.c.l.b16 %v155
    %v492 = vunpack.c.l.b16 %v156
    %v493 = vunpack.c.l.b16 %v157
    %v494 = vunpack.c.l.b16 %v158
    %v495 = vunpack.c.l.b16 %v159
    %v496 = vunpack.c.l.b16 %v160
    %v497 = vunpack.c.l.b16 %v161
    %v498 = vunpack.c.l.b16 %v162
    %v499 = vunpack.c.l.b16 %v163
    %v500 = vunpack.c.l.b16 %v164
    %v501 = vunpack.c.l.b16 %v165
    %v502 = vunpack.c.l.b16 %v166
    %v503 = vunpack.c.l.b16 %v167
    %v504 = vpack.c.b16 %v377, %v376
    %v505 = vpack.c.b16 %v379, %v378
    %v506 = vpack.c.b16 %v381, %v380
    %v507 = vpack.c.b16 %v383, %v382
    %v508 = vpack.c.b16 %v385, %v384
    %v509 = vpack.c.b16 %v387, %v386
    %v510 = vpack.c.b16 %v389, %v388
    %v511 = vpack.c.b16 %v391, %v390
    %v512 = vpack.c.b16 %v393, %v392
    %v513 = vpack.c.b16 %v395, %v394
    %v514 = vpack.c.b16 %v397, %v396
    %v515 = vpack.c.b16 %v399, %v398
    %v516 = vpack.c.b16 %v401, %v400
    %v517 = vpack.c.b16 %v403, %v402
    %v518 = vpack.c.b16 %v405, %v404
    %v519 = vpack.c.b16 %v407, %v406
    %v520 = vpack.c.b16 %v409, %v408
    %v521 = vpack.c.b16 %v411, %v410
    %v522 = vpack.c.b16 %v413, %v412
    %v523 = vpack.c.b16 %v415, %v414
    %v524 = vpack.c.b16 %v417, %v416
    %v525 = vpack.c.b16 %v419, %v418
    %v526 = vpack.c.b16 %v421, %v420
    %v527 = vpack.c.b16 %v423, %v422
    %v528 = vpack.c.b16 %v425, %v424
    %v529 = vpack.c.b16 %v427, %v426
    %v530 = vpack.c.b16 %v429, %v428
    %v531 = vpack.c.b16 %v431, %v430
    %v532 = vpack.c.b16 %v433, %v432
    %v533 = vpack.c.b16 %v435, %v434
    %v534 = vpack.c.b16 %v437, %v436
    %v535 = vpack.c.b16 %v439, %v438
    %v536 = vpack.c.b16 %v441, %v440
    %v537 = vpack.c.b16 %v443, %v442
    %v538 = vpack.c.b16 %v445, %v444
    %v539 = vpack.c.b16 %v447, %v446
    %v540 = vpack.c.b16 %v449, %v448
    %v541 = vpack.c.b16 %v451, %v450
    %v542 = vpack.c.b16 %v453, %v452
    %v543 = vpack.c.b16 %v455, %v454
    %v544 = vpack.c.b16 %v457, %v456
    %v545 = vpack.c.b16 %v459, %v458
    %v546 = vpack.c.b16 %v461, %v460
    %v547 = vpack.c.b16 %v463, %v462
    %v548 = vpack.c.b16 %v465, %v464
    %v549 = vpack.c.b16 %v467, %v466
    %v550 = vpack.c.b16 %v469, %v468
    %v551 = vpack.c.b16 %v471, %v470
    %v552 = vpack.c.b16 %v473, %v472
    %v553 = vpack.c.b16 %v475, %v474
    %v554 = vpack.c.b16 %v477, %v476
    %v555 = vpack.c.b16 %v479, %v478
    %v556 = vpack.c.b16 %v481, %v480
    %v557 = vpack.c.b16 %v483, %v482
    %v558 = vpack.c.b16 %v485, %v484
    %v559 = vpack.c.b16 %v487, %v486
    %v560 = vpack.c.b16 %v489, %v488
    %v561 = vpack.c.b16 %v491, %v490
    %v562 = vpack.c.b16 %v493, %v492
    %v563 = vpack.c.b16 %v495, %v494
    %v564 = vpack.c.b16 %v497, %v496
    %v565 = vpack.c.b16 %v499, %v498
    %v566 = vpack.c.b16 %v501, %v500
    %v567 = vpack.c.b16 %v503, %v502
    %632 = vmatprep.subr.bf16.mxu0 0
    %633 = vmatpush1.bf16.msra.mxu0 %v511
    %634 = vmatprep.subr.bf16.mxu0 0
    %635 = vmatpush1.bf16.msra.mxu0 %v510
    %636 = vmatprep.subr.bf16.mxu0 0
    %637 = vmatpush1.bf16.msra.mxu0 %v509
    %638 = vmatprep.subr.bf16.mxu0 0
    %639 = vmatpush1.bf16.msra.mxu0 %v508
    %640 = vmatprep.subr.bf16.mxu0 0
    %641 = vmatpush1.bf16.msra.mxu0 %v507
    %642 = vmatprep.subr.bf16.mxu0 0
    %643 = vmatpush1.bf16.msra.mxu0 %v506
    %644 = vmatprep.subr.bf16.mxu0 0
    %645 = vmatpush1.bf16.msra.mxu0 %v505
    %646 = vmatprep.subr.bf16.mxu0 0
    %647 = vmatpush1.bf16.msra.mxu0 %v504
    %648 = vmatprep.subr.bf16.mxu0 0
    %649 = vmatpush2.bf16.msra.mxu0 %v519
    %650 = vmatprep.subr.bf16.mxu0 0
    %651 = vmatpush2.bf16.msra.mxu0 %v518
    %652 = vmatprep.subr.bf16.mxu0 0
    %653 = vmatpush2.bf16.msra.mxu0 %v517
    %654 = vmatprep.subr.bf16.mxu0 0
    %655 = vmatpush2.bf16.msra.mxu0 %v516
    %656 = vmatprep.subr.bf16.mxu0 0
    %657 = vmatpush2.bf16.msra.mxu0 %v515
    %658 = vmatprep.subr.bf16.mxu0 0
    %659 = vmatpush2.bf16.msra.mxu0 %v514
    %660 = vmatprep.subr.bf16.mxu0 0
    %661 = vmatpush2.bf16.msra.mxu0 %v513
    %662 = vmatprep.subr.bf16.mxu0 0
    %663 = vmatpush2.bf16.msra.mxu0 %v512
    %664 = vmatprep.mubr.bf16.mxu0 %v217
    %665 = vmatmul.mubr.bf16.gmra.mxu0 %v216
    %v666 = vpop.f32.mrf.mxu0
    %v667 = vadd.f32 0.0, %v666
    %v668 = vpop.f32.mrf.mxu0
    %v669 = vpop.f32.mrf.mxu0
    %v670 = vadd.f32 0.0, %v669
    %v671 = vpop.f32.mrf.mxu0
    %672 = vmatprep.mubr.bf16.mxu0 %v225
    %673 = vmatmul.mubr.bf16.gmra.mxu0 %v224
    %v674 = vpop.f32.mrf.mxu0
    %v675 = vadd.f32 0.0, %v674
    %v676 = vpop.f32.mrf.mxu0
    %v677 = vpop.f32.mrf.mxu0
    %v678 = vadd.f32 0.0, %v677
    %v679 = vpop.f32.mrf.mxu0
    %680 = vdwg.mxu0
    %681 = vmatprep.subr.bf16.mxu0 0
    %682 = vmatpush1.bf16.msra.mxu0 %v527
    %683 = vmatprep.subr.bf16.mxu0 0
    %684 = vmatpush1.bf16.msra.mxu0 %v526
    %685 = vmatprep.subr.bf16.mxu0 0
    %686 = vmatpush1.bf16.msra.mxu0 %v525
    %687 = vmatprep.subr.bf16.mxu0 0
    %688 = vmatpush1.bf16.msra.mxu0 %v524
    %689 = vmatprep.subr.bf16.mxu0 0
    %690 = vmatpush1.bf16.msra.mxu0 %v523
    %691 = vmatprep.subr.bf16.mxu0 0
    %692 = vmatpush1.bf16.msra.mxu0 %v522
    %693 = vmatprep.subr.bf16.mxu0 0
    %694 = vmatpush1.bf16.msra.mxu0 %v521
    %695 = vmatprep.subr.bf16.mxu0 0
    %696 = vmatpush1.bf16.msra.mxu0 %v520
    %697 = vmatprep.subr.bf16.mxu0 0
    %698 = vmatpush2.bf16.msra.mxu0 %v535
    %699 = vmatprep.subr.bf16.mxu0 0
    %700 = vmatpush2.bf16.msra.mxu0 %v534
    %701 = vmatprep.subr.bf16.mxu0 0
    %702 = vmatpush2.bf16.msra.mxu0 %v533
    %703 = vmatprep.subr.bf16.mxu0 0
    %704 = vmatpush2.bf16.msra.mxu0 %v532
    %705 = vmatprep.subr.bf16.mxu0 0
    %706 = vmatpush2.bf16.msra.mxu0 %v531
    %707 = vmatprep.subr.bf16.mxu0 0
    %708 = vmatpush2.bf16.msra.mxu0 %v530
    %709 = vmatprep.subr.bf16.mxu0 0
    %710 = vmatpush2.bf16.msra.mxu0 %v529
    %711 = vmatprep.subr.bf16.mxu0 0
    %712 = vmatpush2.bf16.msra.mxu0 %v528
    %713 = vmatprep.mubr.bf16.mxu0 %v219
    %714 = vmatmul.mubr.bf16.gmra.mxu0 %v218
    %v715 = vpop.f32.mrf.mxu0
    %v716 = vadd.f32 %v667, %v715
    %v717 = vpop.f32.mrf.mxu0
    %v718 = vpop.f32.mrf.mxu0
    %v719 = vadd.f32 %v670, %v718
    %v720 = vpop.f32.mrf.mxu0
    %721 = vmatprep.mubr.bf16.mxu0 %v227
    %722 = vmatmul.mubr.bf16.gmra.mxu0 %v226
    %v723 = vpop.f32.mrf.mxu0
    %v724 = vadd.f32 %v675, %v723
    %v725 = vpop.f32.mrf.mxu0
    %v726 = vpop.f32.mrf.mxu0
    %v727 = vadd.f32 %v678, %v726
    %v728 = vpop.f32.mrf.mxu0
    %729 = vdwg.mxu0
    %730 = vmatprep.subr.bf16.mxu0 0
    %731 = vmatpush1.bf16.msra.mxu0 %v543
    %732 = vmatprep.subr.bf16.mxu0 0
    %733 = vmatpush1.bf16.msra.mxu0 %v542
    %734 = vmatprep.subr.bf16.mxu0 0
    %735 = vmatpush1.bf16.msra.mxu0 %v541
    %736 = vmatprep.subr.bf16.mxu0 0
    %737 = vmatpush1.bf16.msra.mxu0 %v540
    %738 = vmatprep.subr.bf16.mxu0 0
    %739 = vmatpush1.bf16.msra.mxu0 %v539
    %740 = vmatprep.subr.bf16.mxu0 0
    %741 = vmatpush1.bf16.msra.mxu0 %v538
    %742 = vmatprep.subr.bf16.mxu0 0
    %743 = vmatpush1.bf16.msra.mxu0 %v537
    %744 = vmatprep.subr.bf16.mxu0 0
    %745 = vmatpush1.bf16.msra.mxu0 %v536
    %746 = vmatprep.subr.bf16.mxu0 0
    %747 = vmatpush2.bf16.msra.mxu0 %v551
    %748 = vmatprep.subr.bf16.mxu0 0
    %749 = vmatpush2.bf16.msra.mxu0 %v550
    %750 = vmatprep.subr.bf16.mxu0 0
    %751 = vmatpush2.bf16.msra.mxu0 %v549
    %752 = vmatprep.subr.bf16.mxu0 0
    %753 = vmatpush2.bf16.msra.mxu0 %v548
    %754 = vmatprep.subr.bf16.mxu0 0
    %755 = vmatpush2.bf16.msra.mxu0 %v547
    %756 = vmatprep.subr.bf16.mxu0 0
    %757 = vmatpush2.bf16.msra.mxu0 %v546
    %758 = vmatprep.subr.bf16.mxu0 0
    %759 = vmatpush2.bf16.msra.mxu0 %v545
    %760 = vmatprep.subr.bf16.mxu0 0
    %761 = vmatpush2.bf16.msra.mxu0 %v544
    %762 = vmatprep.mubr.bf16.mxu0 %v221
    %763 = vmatmul.mubr.bf16.gmra.mxu0 %v220
    %v764 = vpop.f32.mrf.mxu0
    %v765 = vadd.f32 %v716, %v764
    %v766 = vpop.f32.mrf.mxu0
    %v767 = vpop.f32.mrf.mxu0
    %v768 = vadd.f32 %v719, %v767
    %v769 = vpop.f32.mrf.mxu0
    %770 = vmatprep.mubr.bf16.mxu0 %v229
    %771 = vmatmul.mubr.bf16.gmra.mxu0 %v228
    %v772 = vpop.f32.mrf.mxu0
    %v773 = vadd.f32 %v724, %v772
    %v774 = vpop.f32.mrf.mxu0
    %v775 = vpop.f32.mrf.mxu0
    %v776 = vadd.f32 %v727, %v775
    %v777 = vpop.f32.mrf.mxu0
    %778 = vdwg.mxu0
    %779 = vmatprep.subr.bf16.mxu0 0
    %780 = vmatpush1.bf16.msra.mxu0 %v559
    %781 = vmatprep.subr.bf16.mxu0 0
    %782 = vmatpush1.bf16.msra.mxu0 %v558
    %783 = vmatprep.subr.bf16.mxu0 0
    %784 = vmatpush1.bf16.msra.mxu0 %v557
    %785 = vmatprep.subr.bf16.mxu0 0
    %786 = vmatpush1.bf16.msra.mxu0 %v556
    %787 = vmatprep.subr.bf16.mxu0 0
    %788 = vmatpush1.bf16.msra.mxu0 %v555
    %789 = vmatprep.subr.bf16.mxu0 0
    %790 = vmatpush1.bf16.msra.mxu0 %v554
    %791 = vmatprep.subr.bf16.mxu0 0
    %792 = vmatpush1.bf16.msra.mxu0 %v553
    %793 = vmatprep.subr.bf16.mxu0 0
    %794 = vmatpush1.bf16.msra.mxu0 %v552
    %795 = vmatprep.subr.bf16.mxu0 0
    %796 = vmatpush2.bf16.msra.mxu0 %v567
    %797 = vmatprep.subr.bf16.mxu0 0
    %798 = vmatpush2.bf16.msra.mxu0 %v566
    %799 = vmatprep.subr.bf16.mxu0 0
    %800 = vmatpush2.bf16.msra.mxu0 %v565
    %801 = vmatprep.subr.bf16.mxu0 0
    %802 = vmatpush2.bf16.msra.mxu0 %v564
    %803 = vmatprep.subr.bf16.mxu0 0
    %804 = vmatpush2.bf16.msra.mxu0 %v563
    %805 = vmatprep.subr.bf16.mxu0 0
    %806 = vmatpush2.bf16.msra.mxu0 %v562
    %807 = vmatprep.subr.bf16.mxu0 0
    %808 = vmatpush2.bf16.msra.mxu0 %v561
    %809 = vmatprep.subr.bf16.mxu0 0
    %810 = vmatpush2.bf16.msra.mxu0 %v560
    %811 = vmatprep.mubr.bf16.mxu0 %v223
    %812 = vmatmul.mubr.bf16.gmra.mxu0 %v222
    %v813 = vpop.f32.mrf.mxu0
    %v814 = vadd.f32 %v765, %v813
    %v815 = vpop.f32.mrf.mxu0
    %v816 = vpop.f32.mrf.mxu0
    %v817 = vadd.f32 %v768, %v816
    %v818 = vpop.f32.mrf.mxu0
    %819 = vmatprep.mubr.bf16.mxu0 %v231
    %820 = vmatmul.mubr.bf16.gmra.mxu0 %v230
    %v821 = vpop.f32.mrf.mxu0
    %v822 = vadd.f32 %v773, %v821
    %v823 = vpop.f32.mrf.mxu0
    %v824 = vpop.f32.mrf.mxu0
    %v825 = vadd.f32 %v776, %v824
    %v826 = vpop.f32.mrf.mxu0
    %827 = vdwg.mxu0
    %v828 = vmul.f32 %v814, 0.2
    %v829 = vmul.f32 %v817, 0.2
    %v830 = vmul.f32 %v822, 0.2
    %v831 = vmul.f32 %v825, 0.2
    %v832 = vmax.f32 %v814, %v828
    %v833 = vmax.f32 %v817, %v829
    %v834 = vmax.f32 %v822, %v830
    %v835 = vmax.f32 %v825, %v831
    %v836 = vpack.c.bf16 %v833, %v832
    %v837 = vpack.c.bf16 %v835, %v834
    %v838 = vld [vmem:[%s2] sm:$0xf]
    %v839 = vld [vmem:[%s2 + $0x4] sm:$0xf]
    %v840 = vld [vmem:[%s2 + $0x8] sm:$0xf]
    %v841 = vld [vmem:[%s2 + $0xc] sm:$0xf]
    %v842 = vld [vmem:[%s2 + $0x10] sm:$0xf]
    %v843 = vld [vmem:[%s2 + $0x14] sm:$0xf]
    %v844 = vld [vmem:[%s2 + $0x18] sm:$0xf]
    %v845 = vld [vmem:[%s2 + $0x1c] sm:$0xf]
    %v846 = vld [vmem:[%s2 + $0x20] sm:$0xf]
    %v847 = vld [vmem:[%s2 + $0x24] sm:$0xf]
    %v848 = vld [vmem:[%s2 + $0x28] sm:$0xf]
    %v849 = vld [vmem:[%s2 + $0x2c] sm:$0xf]
    %v850 = vld [vmem:[%s2 + $0x30] sm:$0xf]
    %v851 = vld [vmem:[%s2 + $0x34] sm:$0xf]
    %v852 = vld [vmem:[%s2 + $0x38] sm:$0xf]
    %v853 = vld [vmem:[%s2 + $0x3c] sm:$0xf]
    %v870 = vunpack.c.l.b16 %v838
    %v871 = vunpack.c.l.b16 %v839
    %v872 = vunpack.c.l.b16 %v840
    %v873 = vunpack.c.l.b16 %v841
    %v874 = vunpack.c.l.b16 %v842
    %v875 = vunpack.c.l.b16 %v843
    %v876 = vunpack.c.l.b16 %v844
    %v877 = vunpack.c.l.b16 %v845
    %v878 = vunpack.c.l.b16 %v846
    %v879 = vunpack.c.l.b16 %v847
    %v880 = vunpack.c.l.b16 %v848
    %v881 = vunpack.c.l.b16 %v849
    %v882 = vunpack.c.l.b16 %v850
    %v883 = vunpack.c.l.b16 %v851
    %v884 = vunpack.c.l.b16 %v852
    %v885 = vunpack.c.l.b16 %v853
    %v886 = vpack.c.b16 %v871, %v870
    %v887 = vpack.c.b16 %v873, %v872
    %v888 = vpack.c.b16 %v875, %v874
    %v889 = vpack.c.b16 %v877, %v876
    %v890 = vpack.c.b16 %v879, %v878
    %v891 = vpack.c.b16 %v881, %v880
    %v892 = vpack.c.b16 %v883, %v882
    %v893 = vpack.c.b16 %v885, %v884
    %902 = vmatprep.subr.bf16.mxu0 0
    %903 = vmatpush1.bf16.msra.mxu0 %v893
    %904 = vmatprep.subr.bf16.mxu0 0
    %905 = vmatpush1.bf16.msra.mxu0 %v892
    %906 = vmatprep.subr.bf16.mxu0 0
    %907 = vmatpush1.bf16.msra.mxu0 %v891
    %908 = vmatprep.subr.bf16.mxu0 0
    %909 = vmatpush1.bf16.msra.mxu0 %v890
    %910 = vmatprep.subr.bf16.mxu0 0
    %911 = vmatpush1.bf16.msra.mxu0 %v889
    %912 = vmatprep.subr.bf16.mxu0 0
    %913 = vmatpush1.bf16.msra.mxu0 %v888
    %914 = vmatprep.subr.bf16.mxu0 0
    %915 = vmatpush1.bf16.msra.mxu0 %v887
    %916 = vmatprep.subr.bf16.mxu0 0
    %917 = vmatpush1.bf16.msra.mxu0 %v886
    %918 = vmatprep.subr.bf16.mxu0 0
    %919 = vmatpush2.bf16.msra.mxu0 0
    %920 = vmatprep.subr.bf16.mxu0 0
    %921 = vmatpush2.bf16.msra.mxu0 0
    %922 = vmatprep.subr.bf16.mxu0 0
    %923 = vmatpush2.bf16.msra.mxu0 0
    %924 = vmatprep.subr.bf16.mxu0 0
    %925 = vmatpush2.bf16.msra.mxu0 0
    %926 = vmatprep.subr.bf16.mxu0 0
    %927 = vmatpush2.bf16.msra.mxu0 0
    %928 = vmatprep.subr.bf16.mxu0 0
    %929 = vmatpush2.bf16.msra.mxu0 0
    %930 = vmatprep.subr.bf16.mxu0 0
    %931 = vmatpush2.bf16.msra.mxu0 0
    %932 = vmatprep.subr.bf16.mxu0 0
    %933 = vmatpush2.bf16.msra.mxu0 0
    %934 = vmatprep.mubr.bf16.mxu0 0
    %935 = vmatmul.mubr.bf16.gmra.mxu0 %v836
    %v936 = vpop.f32.mrf.mxu0
    %v937 = vadd.f32 0.0, %v936
    %v938 = vpop.f32.mrf.mxu0
    %v939 = vpop.f32.mrf.mxu0
    %v940 = vadd.f32 0.0, %v939
    %v941 = vpop.f32.mrf.mxu0
    %942 = vmatprep.mubr.bf16.mxu0 0
    %943 = vmatmul.mubr.bf16.gmra.mxu0 %v837
    %v944 = vpop.f32.mrf.mxu0
    %v945 = vadd.f32 0.0, %v944
    %v946 = vpop.f32.mrf.mxu0
    %v947 = vpop.f32.mrf.mxu0
    %v948 = vadd.f32 0.0, %v947
    %v949 = vpop.f32.mrf.mxu0
    %950 = vdwg.mxu0
    %vm951 = vcmask 130048
    %v952 = vsel %vm951, %v937, 0.0
    %v953 = vsel %vm951, %v940, 0.0
    %v954 = vadd.f32 %v952, %v953
    %v955 = vsel %vm951, %v945, 0.0
    %v956 = vadd.f32 %v954, %v955
    %v957 = vsel %vm951, %v948, 0.0
    %v958 = vadd.f32 %v956, %v957
    %v959 = vrot.slane %v958, 4
    %v960 = vadd.f32 %v958, %v959
    %v961 = vrot.slane %v960, 2
    %v962 = vadd.f32 %v960, %v961
    %v963 = vrot.slane %v962, 1
    %v964 = vadd.f32 %v962, %v963
    %v965 = vmul.f32 %v964, 0.03125
    %v966 = vmul.f32 %v937, %v937
    %v967 = vmul.f32 %v940, %v940
    %v968 = vmul.f32 %v945, %v945
    %v969 = vmul.f32 %v948, %v948
    %v970 = vsel %vm951, %v966, 0.0
    %v971 = vsel %vm951, %v967, 0.0
    %v972 = vadd.f32 %v970, %v971
    %v973 = vsel %vm951, %v968, 0.0
    %v974 = vadd.f32 %v972, %v973
    %v975 = vsel %vm951, %v969, 0.0
    %v976 = vadd.f32 %v974, %v975
    %v977 = vrot.slane %v976, 4
    %v978 = vadd.f32 %v976, %v977
    %v979 = vrot.slane %v978, 2
    %v980 = vadd.f32 %v978, %v979
    %v981 = vrot.slane %v980, 1
    %v982 = vadd.f32 %v980, %v981
    %v983 = vmul.f32 %v982, 0.03125
    %v984 = vmul.f32 %v965, %v965
    %v985 = vsub.f32 %v983, %v984
    %v986 = vld [vmem:[%s3] sm:$0x3]
    %v987 = vadd.f32 %v985, 1e-05
    %v988 = vrsqrt.pop %v987
    %v989 = vmul.f32 %v986, %v988
    %v990 = vmul.f32 %v965, %v989
    %v992 = vrot.slane %v990, 7
    %v994 = vsub.f32 %v986, %v992
    %v995 = vlaneseq
    %v996 = vshrl.u32 %v995, 7
    %v997 = vsub.s32 0, %v996
    %v998 = vrot.slane %v989, %v997
    %v999 = vmul.f32 %v937, %v998
    %v1000 = vmul.f32 %v940, %v998
    %v1001 = vmul.f32 %v945, %v998
    %v1002 = vmul.f32 %v948, %v998
    %v1003 = vlaneseq
    %v1004 = vshrl.u32 %v1003, 7
    %v1005 = vsub.s32 1, %v1004
    %v1006 = vrot.slane %v994, %v1005
    %v1007 = vadd.f32 %v999, %v1006
    %v1008 = vadd.f32 %v1000, %v1006
    %v1009 = vadd.f32 %v1001, %v1006
    %v1010 = vadd.f32 %v1002, %v1006
    %v1011 = vmul.f32 %v1007, 0.2
    %v1012 = vmul.f32 %v1008, 0.2
    %v1013 = vmul.f32 %v1009, 0.2
    %v1014 = vmul.f32 %v1010, 0.2
    %v1015 = vmax.f32 %v1007, %v1011
    %v1016 = vmax.f32 %v1008, %v1012
    %v1017 = vmax.f32 %v1009, %v1013
    %v1018 = vmax.f32 %v1010, %v1014
    %1019 = vst.msk [vmem:[#allocation2] sm:$0xff] %vm951, %v1015
    %1020 = vst.msk [vmem:[#allocation2 + $0x8] sm:$0xff] %vm951, %v1016
    %1021 = vst.msk [vmem:[#allocation2 + $0x10] sm:$0xff] %vm951, %v1017
    %1022 = vst.msk [vmem:[#allocation2 + $0x18] sm:$0xff] %vm951, %v1018
    %v1023 = vld [vmem:[%s4] sm:$0xff]
    %v1024 = vld [vmem:[%s4 + $0x8] sm:$0xff]
    %v1025 = vmul.f32 %v1015, %v1023
    %v1026 = vmul.f32 %v1016, %v1024
    %v1027 = vmul.f32 %v1017, %v1023
    %v1028 = vmul.f32 %v1018, %v1024
    %v1029 = vsel %vm951, %v1025, 0.0
    %1030 = vadd.xlane.f32.xlu0 %v1029
    %v1031 = vpop.xlane.xlu0 %1030
    %v1032 = vsel %vm951, %v1026, 0.0
    %1033 = vadd.xlane.f32.xlu0 %v1032
    %v1034 = vpop.xlane.xlu0 %1033
    %v1035 = vsel %vm951, %v1027, 0.0
    %1036 = vadd.xlane.f32.xlu0 %v1035
    %v1037 = vpop.xlane.xlu0 %1036
    %v1038 = vsel %vm951, %v1028, 0.0
    %1039 = vadd.xlane.f32.xlu0 %v1038
    %v1040 = vpop.xlane.xlu0 %1039
    %v1041 = vadd.f32 %v1031, %v1034
    %v1042 = vrot.slane %v1041, 4
    %v1043 = vadd.f32 %v1041, %v1042
    %v1044 = vrot.slane %v1043, 2
    %v1045 = vadd.f32 %v1043, %v1044
    %v1046 = vrot.slane %v1045, 1
    %v1047 = vadd.f32 %v1045, %v1046
    %v1048 = vadd.f32 %v1037, %v1040
    %v1049 = vrot.slane %v1048, 4
    %v1050 = vadd.f32 %v1048, %v1049
    %v1051 = vrot.slane %v1050, 2
    %v1052 = vadd.f32 %v1050, %v1051
    %v1053 = vrot.slane %v1052, 1
    %v1054 = vadd.f32 %v1052, %v1053
    %v1055 = vxor.u32 %v1047, 2147483648
    %v1056 = vxor.u32 %v1054, 2147483648
    %v1057 = vmul.f32 %v1055, 1.442695
    %v1058 = vpow.pop %v1057
    %v1059 = vmul.f32 %v1056, 1.442695
    %v1060 = vpow.pop %v1059
    %v1061 = vadd.f32 %v1058, 1.0
    %v1062 = vadd.f32 %v1060, 1.0
    %v1063 = vrcp.pop %v1061
    %v1064 = vmul.f32 1.0, %v1063
    %v1065 = vrcp.pop %v1062
    %v1066 = vmul.f32 1.0, %v1065
    %vm1069 = vcmask 1041409
    %v1070 = vsel %vm1069, %v1066, %v1064
    %vm1072 = vcmask 1024
    %1073 = vst.msk [vmem:[%s6] sm:$0x3] %vm1072, %v1070
    // Predicated region
    $region22: #{netd_forward.1} parent=1 // pred_check
      _
    $region23: #{netd_forward.1} parent=1 // pred_check_branch
      %1075 = sbr.rel (0) target = $region25
    $region24: #{netd_forward.1} parent=1 // pred_region
      %s1077 = ssub.s32 512, 512
      %1078 = vsyncadd [#allocation3], %s1077
      %s1079 = sshll.u32 [#allocation2], 4
      %s1080 = int_to_ptr.vmem [resolvable:$true] %s1079
      %1085 = dma.vmem_to_hbm [thread:$0]  %s1080, 512, %s5, [#allocation3], 128, 128, 8
    $region25: #{netd_forward.1} parent=1 // pred_fallthru
      _
    // Predicated region
    $region26: #{netd_forward.1} parent=1 // pred_check
      _
    $region27: #{netd_forward.1} parent=1 // pred_check_branch
      %1087 = sbr.rel (0) target = $region29
    $region28: #{netd_forward.1} parent=1 // pred_region
      _
    $region29: #{netd_forward.1} parent=1 // pred_fallthru
      _
    // Predicated region
    $region30: #{netd_forward.1} parent=1 // pred_check
      _
    $region31: #{netd_forward.1} parent=1 // pred_check_branch
      %1089 = sbr.rel (0) target = $region33
    $region32: #{netd_forward.1} parent=1 // pred_region
      %1090 = dma.done [#allocation3], 512
    $region33: #{netd_forward.1} parent=1 // pred_fallthru
      _
    // Predicated region
    $region34: #{netd_forward.1} parent=1 // pred_check
      _
    $region35: #{netd_forward.1} parent=1 // pred_check_branch
      %1092 = sbr.rel (0) target = $region37
    $region36: #{netd_forward.1} parent=1 // pred_region
      _
    $region37: #{netd_forward.1} parent=1 // pred_fallthru
      _
    %1093 = vsyncpa [#allocation3], 1

</llo_original>
